<compile_context>
chip_gen: v7x
topology: tpu7x:2x2x1
jax: 0.10.0
libtpu: 0.0.40
codegen_flags: <defaults>
</compile_context>

<pallas_src>
import jax
import jax.numpy as jnp
from jax.experimental import pallas as pl
from jax.experimental.pallas import tpu as pltpu

# ----- model dimensions (small, synthetic) -----
B = 2          # batch
S = 8          # sequence length
H = 32         # text hidden dim
U = 16         # user feature dim
F = 32         # fused feature dim per sub-model
M = 4          # number of ensemble members
C = 2          # number of classes
MF = M * F     # 128 -> exactly one full lane row
MC = M * C     # 8   -> ensemble feature width

# ----- weight-slab row offsets (all multiples of 16 -> aligned bf16 tiles) -----
R_WTU = 0                 # rows [0,48)    packed text+user weights (H+U, 128)
R_BTU = 48                # row  48        combined text+user bias  (1, 128)
R_WC = 64                 # rows [64,192)  block-diag difference classifier (128, 128)
R_BC = 192                # row  192       classifier difference bias, cols [0,MC) real
R_WF = 208                # rows [208,216) fusion weights / temp (MC, 128), cols [0,C) real
R_BF = 224                # row  224       fusion bias / temp, cols [0,C) real
ROWS = 240


def ensemble_kernel(emb_ref, aux_ref, w_ref, out_ref):
    """Calibrated ensemble logits for the whole (tiny) batch in one pass."""
    emb = emb_ref[...]                       # (B, S, H)  f32
    aux = aux_ref[...]                       # (B, 128)   f32: [0,S)=mask, [S,S+U)=user
    mask = aux[:, 0:S]                       # (B, S)
    user = aux[:, S:S + U]                   # (B, U)

    # ---- shared text feature: masked mean pooling over the sequence ----
    # TODO(synk): at production sequence lengths, move this onto the MXU as an
    # einsum('bsh,bs->bh') contraction; at S=8 the VPU cost is negligible.
    summed = jnp.sum(emb * mask[:, :, None], axis=1)                  # (B, H)
    denom = jnp.maximum(jnp.sum(mask, axis=1, keepdims=True), 1.0)    # (B, 1)
    pooled = summed * pl.reciprocal(denom, approx=True)               # (B, H)

    # ---- all 4 sub-models: ONE fused text+user projection (rows [0, H+U)) ----
    feats = jnp.concatenate([pooled, user], axis=-1).astype(jnp.bfloat16)  # (B, 48)
    wtu = w_ref[pl.ds(R_WTU, H + U), :]                               # (48, 128) bf16
    b_tu = w_ref[pl.ds(R_BTU, 1), :].astype(jnp.float32)              # (1, 128)  f32
    fused = jnp.maximum(
        jnp.dot(feats, wtu, preferred_element_type=jnp.float32) + b_tu, 0.0)  # (B, 128)

    # ---- block-diagonal signed-difference classifier (class-major cols) ----
    # column c*M+m yields  l_{m,c} - l_{m,1-c}, so the per-model 2-class
    # softmax is exactly an elementwise sigmoid: no lane pairing/extracts.
    wc = w_ref[pl.ds(R_WC, MF), :]                                    # (128, 128) bf16
    bc = w_ref[pl.ds(R_BC, 1), :].astype(jnp.float32)                 # (1, 128)   f32
    d = jnp.dot(fused.astype(jnp.bfloat16), wc,
                preferred_element_type=jnp.float32) + bc              # (B, 128)

    d8 = d[:, 0:MC]                                                   # (B, 8) real logit diffs
    # exact reciprocal on the probability/calibration path (approx only in pool)
    probs = pl.reciprocal(1.0 + jnp.exp(-d8), approx=False)           # (B, 8) class-major probs

    # ---- fusion Linear(8, 2): single K=8 matmul, temperature folded in ----
    wf = w_ref[pl.ds(R_WF, MC), :].astype(jnp.float32)                # (8, 128) f32
    bf = w_ref[pl.ds(R_BF, 1), :].astype(jnp.float32)                 # (1, 128) f32
    # lane-dense store: full (B, 128) write, real logits live in cols [0, C)
    out_ref[...] = jnp.dot(probs, wf, preferred_element_type=jnp.float32) + bf


def ensemble_forward(token_emb, aux, weight_slab):
    vmem = pl.BlockSpec(memory_space=pltpu.MemorySpace.VMEM)
    out_full = pl.pallas_call(
        ensemble_kernel,
        out_shape=jax.ShapeDtypeStruct((B, 128), jnp.float32),   # lane-dense output
        in_specs=[vmem, vmem, vmem],    # emb, packed mask+user, packed weight slab
        out_specs=vmem,
    )(token_emb, aux, weight_slab)
    return out_full[:, :C]              # narrow slice stays outside the kernel


def init_params(key):
    """Raw per-model parameters, matching the torch module structure."""
    ks = jax.random.split(key, 8)
    scale = 0.1
    W_text = scale * jax.random.normal(ks[0], (M, H, F), jnp.float32)
    b_text = scale * jax.random.normal(ks[1], (M, F), jnp.float32)
    W_user = scale * jax.random.normal(ks[2], (M, U, F), jnp.float32)
    b_user = scale * jax.random.normal(ks[3], (M, F), jnp.float32)
    W_cls = scale * jax.random.normal(ks[4], (M, F, C), jnp.float32)
    b_cls = scale * jax.random.normal(ks[5], (M, C), jnp.float32)
    W_fusion = scale * jax.random.normal(ks[6], (M * C, C), jnp.float32)
    b_fusion = scale * jax.random.normal(ks[7], (C,), jnp.float32)

    # variant tweaks (models: 0=default, 1=text_focus, 2=user_focus, 3=balanced)
    W_text = W_text.at[1].multiply(1.2)   # text_focus: text weights * 1.2
    W_user = W_user.at[2].multiply(1.2)   # user_focus: user weights * 1.2

    temp = jnp.full((1,), 1.5, jnp.float32)  # nn.Parameter(torch.ones(1) * 1.5)

    return {
        "W_text": W_text, "b_text": b_text,
        "W_user": W_user, "b_user": b_user,
        "W_cls": W_cls, "b_cls": b_cls,
        "W_fusion": W_fusion, "b_fusion": b_fusion,
        "temp": temp,
    }


def pack_params(p):
    """Pack all weights into one lane-dense (ROWS, 128) bf16 slab.

    Column ordering for the classifier/ensemble stage is CLASS-MAJOR:
    column c*M + m  <->  class c of model m.  The classifier block stores the
    SIGNED DIFFERENCE  W_cls[m,:,c] - W_cls[m,:,1-c]  so the per-model 2-class
    softmax reduces to an elementwise sigmoid in the kernel.  The fusion
    weights are reordered to the same convention and divided by the
    temperature (folding the final `logits / temp` into the linear layer).
    """
    W_text, b_text = p["W_text"], p["b_text"]
    W_user, b_user = p["W_user"], p["b_user"]
    W_cls, b_cls = p["W_cls"], p["b_cls"]
    W_fus, b_fus = p["W_fusion"], p["b_fusion"]
    temp = p["temp"][0]

    # packed text/user weights: [h, m*F + f] = W[m, h, f]; contiguous rows [0, H+U)
    wt = jnp.transpose(W_text, (1, 0, 2)).reshape(H, MF)
    wu = jnp.transpose(W_user, (1, 0, 2)).reshape(U, MF)
    b_tu = (b_text + b_user).reshape(MF)

    # block-diagonal signed-difference classifier, class-major output columns
    wc = jnp.zeros((MF, 128), jnp.float32)
    bc = jnp.zeros((128,), jnp.float32)
    for m_ in range(M):
        for c_ in range(C):
            col = c_ * M + m_
            wc = wc.at[m_ * F:(m_ + 1) * F, col].set(
                W_cls[m_, :, c_] - W_cls[m_, :, 1 - c_])
            bc = bc.at[col].set(b_cls[m_, c_] - b_cls[m_, 1 - c_])

    # fusion weights reordered class-major and temperature-folded
    # (torch ensemble feature order is model-major: row 2*m + c)
    wf = jnp.zeros((MC, 128), jnp.float32)
    bf = jnp.zeros((128,), jnp.float32)
    for m_ in range(M):
        for c_ in range(C):
            wf = wf.at[c_ * M + m_, 0:C].set(W_fus[2 * m_ + c_, :] / temp)
    bf = bf.at[0:C].set(b_fus / temp)

    slab = jnp.zeros((ROWS, 128), jnp.float32)
    slab = slab.at[R_WTU:R_WTU + H, :].set(wt)
    slab = slab.at[R_WTU + H:R_WTU + H + U, :].set(wu)
    slab = slab.at[R_BTU, :].set(b_tu)
    slab = slab.at[R_WC:R_WC + MF, :].set(wc)
    slab = slab.at[R_BC, :].set(bc)
    slab = slab.at[R_WF:R_WF + MC, :].set(wf)
    slab = slab.at[R_BF, :].set(bf)
    return slab.astype(jnp.bfloat16)


def pack_inputs(attention_mask, user_features):
    """Pack the tiny side inputs into one lane-dense (B, 128) operand."""
    aux = jnp.zeros((B, 128), jnp.float32)
    aux = aux.at[:, 0:S].set(attention_mask)
    aux = aux.at[:, S:S + U].set(user_features)
    return aux


if __name__ == "__main__":
    key = jax.random.PRNGKey(0)
    k_emb, k_ids, k_user, k_params = jax.random.split(key, 4)

    vocab = 64
    # shared text extractor: a single embedding table used by all variants
    embedding_table = 0.1 * jax.random.normal(k_emb, (vocab, H), jnp.float32)

    input_ids = jax.random.randint(k_ids, (B, S), 0, vocab, jnp.int32)
    attention_mask = jnp.ones((B, S), jnp.float32).at[:, S - 2:].set(0.0)
    user_features = jax.random.normal(k_user, (B, U), jnp.float32)

    # glue: embedding lookup (gather) stays in plain JAX
    token_emb = jnp.take(embedding_table, input_ids, axis=0)   # (B, S, H)

    params = init_params(k_params)
    weight_slab = pack_params(params)                          # (ROWS, 128) bf16
    aux = pack_inputs(attention_mask, user_features)           # (B, 128)   f32

    out = ensemble_forward(token_emb, aux, weight_slab)
    out = jax.block_until_ready(out)
    assert out.shape == (B, C) and out.dtype == jnp.float32
    assert bool(jnp.all(jnp.isfinite(out)))
    print("KERNEL_OK")
</pallas_src>

<mosaic_0001>
module attributes {stable_mosaic.version = 11 : i64} {
  func.func @ensemble_kernel(%arg0: memref<2x8x32xf32, #tpu.memory_space<vmem>>, %arg1: memref<2x128xf32, #tpu.memory_space<vmem>>, %arg2: memref<240x128xbf16, #tpu.memory_space<vmem>>, %arg3: memref<2x128xf32, #tpu.memory_space<vmem>>) attributes {dimension_semantics = [], scalar_prefetch = 0 : i64, scratch_operands = 0 : i64, tpu.core_type = #tpu.core_type<tc>} {
    %c0 = arith.constant 0 : index
    %c0_0 = arith.constant 0 : index
    %c0_1 = arith.constant 0 : index
    %0 = vector.load %arg0[%c0, %c0_0, %c0_1] : memref<2x8x32xf32, #tpu.memory_space<vmem>>, vector<2x8x32xf32>
    %c0_2 = arith.constant 0 : index
    %c0_3 = arith.constant 0 : index
    %1 = vector.load %arg1[%c0_2, %c0_3] : memref<2x128xf32, #tpu.memory_space<vmem>>, vector<2x128xf32>
    %2 = vector.extract_strided_slice %1 {offsets = [0, 0], sizes = [2, 8], strides = [1, 1]} : vector<2x128xf32> to vector<2x8xf32>
    %3 = vector.extract_strided_slice %1 {offsets = [0, 8], sizes = [2, 16], strides = [1, 1]} : vector<2x128xf32> to vector<2x16xf32>
    %4 = vector.shape_cast %2 : vector<2x8xf32> to vector<2x8x1xf32>
    %5 = vector.broadcast %4 : vector<2x8x1xf32> to vector<2x8x32xf32>
    %6 = arith.mulf %0, %5 : vector<2x8x32xf32>
    %cst = arith.constant dense<0.000000e+00> : vector<2x32xf32>
    %7 = vector.multi_reduction <add>, %6, %cst [1] : vector<2x8x32xf32> to vector<2x32xf32>
    %cst_4 = arith.constant dense<0.000000e+00> : vector<2xf32>
    %8 = vector.multi_reduction <add>, %2, %cst_4 [1] : vector<2x8xf32> to vector<2xf32>
    %9 = vector.shape_cast %8 : vector<2xf32> to vector<2x1xf32>
    %cst_5 = arith.constant 1.000000e+00 : f32
    %10 = vector.broadcast %cst_5 : f32 to vector<2x1xf32>
    %11 = arith.maximumf %9, %10 : vector<2x1xf32>
    %12 = tpu.reciprocal %11 {approx = true} : vector<2x1xf32> -> vector<2x1xf32>
    %13 = vector.broadcast %12 : vector<2x1xf32> to vector<2x32xf32>
    %14 = arith.mulf %7, %13 : vector<2x32xf32>
    %15 = tpu.concatenate %14, %3 in 1 : vector<2x32xf32>, vector<2x16xf32> -> vector<2x48xf32>
    %16 = arith.truncf %15 : vector<2x48xf32> to vector<2x48xbf16>
    %c0_6 = arith.constant 0 : index
    %c0_7 = arith.constant 0 : index
    %17 = vector.load %arg2[%c0_6, %c0_7] : memref<240x128xbf16, #tpu.memory_space<vmem>>, vector<48x128xbf16>
    %c48 = arith.constant 48 : index
    %c0_8 = arith.constant 0 : index
    %18 = vector.load %arg2[%c48, %c0_8] : memref<240x128xbf16, #tpu.memory_space<vmem>>, vector<1x128xbf16>
    %19 = arith.extf %18 : vector<1x128xbf16> to vector<1x128xf32>
    %cst_9 = arith.constant dense<0.000000e+00> : vector<2x128xf32>
    %20 = tpu.matmul %16, %17, %cst_9 {dimension_numbers = #tpu.dot_dimension_numbers<[1], [0], [0], [1], [0, 0, 1, 1], [], []>} : vector<2x48xbf16>, vector<48x128xbf16>, vector<2x128xf32> -> vector<2x128xf32>
    %21 = vector.broadcast %19 : vector<1x128xf32> to vector<2x128xf32>
    %22 = arith.addf %20, %21 : vector<2x128xf32>
    %cst_10 = arith.constant 0.000000e+00 : f32
    %23 = vector.broadcast %cst_10 : f32 to vector<2x128xf32>
    %24 = arith.maximumf %22, %23 : vector<2x128xf32>
    %c64 = arith.constant 64 : index
    %c0_11 = arith.constant 0 : index
    %25 = vector.load %arg2[%c64, %c0_11] : memref<240x128xbf16, #tpu.memory_space<vmem>>, vector<128x128xbf16>
    %c192 = arith.constant 192 : index
    %c0_12 = arith.constant 0 : index
    %26 = vector.load %arg2[%c192, %c0_12] : memref<240x128xbf16, #tpu.memory_space<vmem>>, vector<1x128xbf16>
    %27 = arith.extf %26 : vector<1x128xbf16> to vector<1x128xf32>
    %28 = arith.truncf %24 : vector<2x128xf32> to vector<2x128xbf16>
    %cst_13 = arith.constant dense<0.000000e+00> : vector<2x128xf32>
    %29 = tpu.matmul %28, %25, %cst_13 {dimension_numbers = #tpu.dot_dimension_numbers<[1], [0], [0], [1], [0, 0, 1, 1], [], []>} : vector<2x128xbf16>, vector<128x128xbf16>, vector<2x128xf32> -> vector<2x128xf32>
    %30 = vector.broadcast %27 : vector<1x128xf32> to vector<2x128xf32>
    %31 = arith.addf %29, %30 : vector<2x128xf32>
    %32 = vector.extract_strided_slice %31 {offsets = [0, 0], sizes = [2, 8], strides = [1, 1]} : vector<2x128xf32> to vector<2x8xf32>
    %cst_14 = arith.constant 0.000000e+00 : f32
    %33 = vector.broadcast %cst_14 : f32 to vector<2x8xf32>
    %34 = arith.subf %33, %32 : vector<2x8xf32>
    %35 = math.exp %34 : vector<2x8xf32>
    %cst_15 = arith.constant 1.000000e+00 : f32
    %36 = vector.broadcast %cst_15 : f32 to vector<2x8xf32>
    %37 = arith.addf %36, %35 : vector<2x8xf32>
    %38 = tpu.reciprocal %37 : vector<2x8xf32> -> vector<2x8xf32>
    %c208 = arith.constant 208 : index
    %c0_16 = arith.constant 0 : index
    %39 = vector.load %arg2[%c208, %c0_16] : memref<240x128xbf16, #tpu.memory_space<vmem>>, vector<8x128xbf16>
    %40 = arith.extf %39 : vector<8x128xbf16> to vector<8x128xf32>
    %c224 = arith.constant 224 : index
    %c0_17 = arith.constant 0 : index
    %41 = vector.load %arg2[%c224, %c0_17] : memref<240x128xbf16, #tpu.memory_space<vmem>>, vector<1x128xbf16>
    %42 = arith.extf %41 : vector<1x128xbf16> to vector<1x128xf32>
    %cst_18 = arith.constant dense<0.000000e+00> : vector<2x128xf32>
    %43 = tpu.matmul %38, %40, %cst_18 {dimension_numbers = #tpu.dot_dimension_numbers<[1], [0], [0], [1], [0, 0, 1, 1], [], []>} : vector<2x8xf32>, vector<8x128xf32>, vector<2x128xf32> -> vector<2x128xf32>
    %44 = vector.broadcast %42 : vector<1x128xf32> to vector<2x128xf32>
    %45 = arith.addf %43, %44 : vector<2x128xf32>
    %c0_19 = arith.constant 0 : index
    %c0_20 = arith.constant 0 : index
    %46 = vector.load %arg3[%c0_19, %c0_20] : memref<2x128xf32, #tpu.memory_space<vmem>>, vector<2x128xf32>
    tpu.vector_store %arg3[%c0_19, %c0_20], %45 {strides = array<i32>} : memref<2x128xf32, #tpu.memory_space<vmem>>, vector<2x128xf32>,
    return
  }
}

</mosaic_0001>

<llo_original>
// kernel: tpu_custom_call.1
$region0: #{tpu_custom_call.1}
  #allocation0 [shape = 'u32[]', space=smem, size = 0x4, offset = 0x4, fixed_abs, tag = 'smem constant byte address 0x4 - core index']
  #allocation1 [shape = 'u32[144,128]{1,0:T(1,128)}', space=vmem, size = 0x12000, scoped, tag = 'internal scratch']
  %s0 = inlined_call_operand.hbm [shape: f32[2,8,32], index: 0, kind: input, shape index: {}]
  %s1 = inlined_call_operand.vmem [shape: f32[2,128], index: 1, kind: input, shape index: {}]
  %s2 = inlined_call_operand.hbm [shape: bf16[240,128], index: 2, kind: input, shape index: {}]
  %s3 = inlined_call_operand.hbm [shape: f32[2,128], index: 3, kind: output, shape index: {}]
  %s4 = sld [smem:[#allocation0]]
  $region30: #{tpu_custom_call.1} parent=0
    _
  %s6 = ssub.s32 1, %s4
  %s7 = scalar_select 0, %s6, %s4
  $region1: #{tpu_custom_call.1} parent=0
    #allocation2 [shape = 'u8[8192]{0}', space=vmem, size = 0x2000, scoped, tag = 'input window, operand 0, single buffered']
    #allocation3 [shape = 's32[1]{0}', space=sflag, size = 0x4, scoped, tag = 'scoped memory for tpu_custom_call.1']
    #allocation4 [shape = 's32[1]{0}', space=sflag, size = 0x4, scoped, tag = 'scoped memory for tpu_custom_call.1']
    #allocation5 [shape = 'u8[61440]{0}', space=vmem, size = 0xf000, scoped, tag = 'input window, operand 2, single buffered']
    #allocation6 [shape = 's32[1]{0}', space=sflag, size = 0x4, scoped, tag = 'scoped memory for tpu_custom_call.1']
    #allocation7 [shape = 'u8[1024]{0}', space=vmem, size = 0x400, scoped, tag = 'output window, operand 0, single buffered']
    %8 = vsyncpa [#allocation3], 0
    %9 = vsyncpa [#allocation6], 0
    %10 = vsyncpa [#allocation4], 0
    // Predicated region
    $region2: #{tpu_custom_call.1} parent=1 // pred_check
      _
    $region3: #{tpu_custom_call.1} parent=1 // pred_check_branch
      %12 = sbr.rel (0) target = $region5
    $region4: #{tpu_custom_call.1} parent=1 // pred_region
      %s14 = ssub.s32 256, 256
      %15 = vsyncadd [#allocation3], %s14
      %s16 = sshll.u32 [#allocation2], 4
      %s17 = int_to_ptr.vmem [resolvable:$true] %s16
      %22 = dma.hbm_to_vmem [thread:$0]  %s0, 256, %s17, [#allocation3], 128, 128, 8
    $region5: #{tpu_custom_call.1} parent=1 // pred_fallthru
      _
    // Predicated region
    $region6: #{tpu_custom_call.1} parent=1 // pred_check
      _
    $region7: #{tpu_custom_call.1} parent=1 // pred_check_branch
      %24 = sbr.rel (0) target = $region9
    $region8: #{tpu_custom_call.1} parent=1 // pred_region
      _
    $region9: #{tpu_custom_call.1} parent=1 // pred_fallthru
      _
    // Predicated region
    $region10: #{tpu_custom_call.1} parent=1 // pred_check
      _
    $region11: #{tpu_custom_call.1} parent=1 // pred_check_branch
      %26 = sbr.rel (0) target = $region13
    $region12: #{tpu_custom_call.1} parent=1 // pred_region
      %s28 = ssub.s32 1920, 1920
      %29 = vsyncadd [#allocation6], %s28
      %s30 = sshll.u32 [#allocation5], 4
      %s31 = int_to_ptr.vmem [resolvable:$true] %s30
      %36 = dma.hbm_to_vmem [thread:$0]  %s2, 1920, %s31, [#allocation6], 64, 64, 4
    $region13: #{tpu_custom_call.1} parent=1 // pred_fallthru
      _
    // Predicated region
    $region14: #{tpu_custom_call.1} parent=1 // pred_check
      _
    $region15: #{tpu_custom_call.1} parent=1 // pred_check_branch
      %38 = sbr.rel (0) target = $region17
    $region16: #{tpu_custom_call.1} parent=1 // pred_region
      %39 = dma.done [#allocation3], 256
    $region17: #{tpu_custom_call.1} parent=1 // pred_fallthru
      _
    // Predicated region
    $region18: #{tpu_custom_call.1} parent=1 // pred_check
      _
    $region19: #{tpu_custom_call.1} parent=1 // pred_check_branch
      %41 = sbr.rel (0) target = $region21
    $region20: #{tpu_custom_call.1} parent=1 // pred_region
      %42 = dma.done [#allocation6], 1920
    $region21: #{tpu_custom_call.1} parent=1 // pred_fallthru
      _
    %v44 = vld [vmem:[#allocation2] sm:$0xff]
    %v45 = vld [vmem:[#allocation2 + $0x8] sm:$0xff]
    %v46 = vld [vmem:[%s1] sm:$0x3]
    %v47 = vlaneseq
    %v48 = vshrl.u32 %v47, 7
    %v49 = vsub.s32 0, %v48
    %v50 = vrot.slane %v46, %v49
    %52 = vbcast.lane.b32.xlu0 %v50, 256
    %v53 = vpop.permute.xlu0 %52
    %v54 = vlaneseq
    %v55 = vshrl.u32 %v54, 7
    %v56 = vsub.s32 1, %v55
    %v57 = vrot.slane %v46, %v56
    %59 = vbcast.lane.b32.xlu0 %v57, 256
    %v60 = vpop.permute.xlu0 %59
    %v61 = vmul.f32 %v44, %v53
    %v62 = vmul.f32 %v45, %v60
    %vm63 = vcmask 261120
    %v64 = vsel %vm63, %v61, 0.0
    %v65 = vrot.slane %v64, 4
    %v66 = vadd.f32 %v64, %v65
    %v67 = vrot.slane %v66, 2
    %v68 = vadd.f32 %v66, %v67
    %v69 = vrot.slane %v68, 1
    %v70 = vadd.f32 %v68, %v69
    %v71 = vsel %vm63, %v62, 0.0
    %v72 = vrot.slane %v71, 4
    %v73 = vadd.f32 %v71, %v72
    %v74 = vrot.slane %v73, 2
    %v75 = vadd.f32 %v73, %v74
    %v76 = vrot.slane %v75, 1
    %v77 = vadd.f32 %v75, %v76
    %vm78 = vcmask 58368
    %v79 = vsel %vm78, %v46, 0.0
    %80 = vadd.xlane.f32.xlu0 %v79
    %v81 = vpop.xlane.xlu0 %80
    %v82 = vmax.f32 %v81, 1.0
    %v83 = vrcp.pop %v82
    %v85 = vrot.slane %v83, 1
    %v88 = vmul.f32 %v70, %v83
    %v89 = vmul.f32 %v77, %v85
    %v92 = vrot.slane %v89, 7
    %vm93 = vcmask 1041409
    %v94 = vsel %vm93, %v92, %v88
    %97 = vrot.lane.b32.xlu0 %v46, 24
    %v98 = vpop.permute.xlu0 %97
    %v100 = vsel %vm63, %v94, %v98
    %v101 = vpack.c.bf16 %v100, %v100
    %v102 = vld [vmem:[#allocation5] sm:$0xf]
    %v103 = vld [vmem:[#allocation5 + $0x4] sm:$0xf]
    %v104 = vld [vmem:[#allocation5 + $0x8] sm:$0xf]
    %v105 = vld [vmem:[#allocation5 + $0xc] sm:$0xf]
    %v106 = vld [vmem:[#allocation5 + $0x10] sm:$0xf]
    %v107 = vld [vmem:[#allocation5 + $0x14] sm:$0xf]
    %v108 = vld [vmem:[#allocation5 + $0x18] sm:$0x1]
    %v109 = vunpack.c.l.bf16 %v108
    %v110 = vlaneseq
    %v111 = vshrl.u32 %v110, 7
    %v112 = vsub.s32 0, %v111
    %v113 = vrot.slane %v109, %v112
    %v120 = vunpack.c.l.b16 %v102
    %v121 = vunpack.c.l.b16 %v103
    %v122 = vunpack.c.l.b16 %v104
    %v123 = vunpack.c.l.b16 %v105
    %v124 = vunpack.c.l.b16 %v106
    %v125 = vunpack.c.l.b16 %v107
    %v126 = vpack.c.b16 %v121, %v120
    %v127 = vpack.c.b16 %v123, %v122
    %v128 = vpack.c.b16 %v125, %v124
    %vm132 = vcmask 392192
    %v134 = vsel %vm132, %v101, 0
    %136 = vmatprep.subr.bf16.mxu0 0
    %137 = vmatpush1.bf16.msra.mxu0 %v126
    %138 = vmatprep.subr.bf16.mxu0 0
    %139 = vmatpush1.bf16.msra.mxu0 %v127
    %140 = vmatprep.subr.bf16.mxu0 0
    %141 = vmatpush1.bf16.msra.mxu0 %v128
    %142 = vmatprep.subr.bf16.mxu0 0
    %143 = vmatpush1.bf16.msra.mxu0 0
    %144 = vmatprep.subr.bf16.mxu0 0
    %145 = vmatpush1.bf16.msra.mxu0 0
    %146 = vmatprep.subr.bf16.mxu0 0
    %147 = vmatpush1.bf16.msra.mxu0 0
    %148 = vmatprep.subr.bf16.mxu0 0
    %149 = vmatpush1.bf16.msra.mxu0 0
    %150 = vmatprep.subr.bf16.mxu0 0
    %151 = vmatpush1.bf16.msra.mxu0 0
    %152 = vmatprep.subr.bf16.mxu0 0
    %153 = vmatpush1.bf16.msra.mxu0 0
    %154 = vmatprep.subr.bf16.mxu0 0
    %155 = vmatpush1.bf16.msra.mxu0 0
    %156 = vmatprep.subr.bf16.mxu0 0
    %157 = vmatpush1.bf16.msra.mxu0 0
    %158 = vmatprep.subr.bf16.mxu0 0
    %159 = vmatpush1.bf16.msra.mxu0 0
    %160 = vmatprep.subr.bf16.mxu0 0
    %161 = vmatpush1.bf16.msra.mxu0 0
    %162 = vmatprep.subr.bf16.mxu0 0
    %163 = vmatpush1.bf16.msra.mxu0 0
    %164 = vmatprep.subr.bf16.mxu0 0
    %165 = vmatpush1.bf16.msra.mxu0 0
    %166 = vmatprep.subr.bf16.mxu0 0
    %167 = vmatpush1.bf16.msra.mxu0 0
    %168 = vmatprep.mubr.bf16.mxu0 0
    %169 = vmatmul.mubr.bf16.gmra.mrb[0].mxu0 %v134
    %v170 = vpop.f32.mrb[0].mxu0
    %v171 = vadd.f32 %v113, %v170
    %v172 = vpop.f32.mrb[0].mxu0
    %v173 = vpop.f32.mrb[0].mxu0
    %v174 = vpop.f32.mrb[0].mxu0
    %175 = vdwg.mxu0
    %v176 = vmax.f32 %v171, 0.0
    %v177 = vld [vmem:[#allocation5 + $0x20] sm:$0xf]
    %v178 = vld [vmem:[#allocation5 + $0x24] sm:$0xf]
    %v179 = vld [vmem:[#allocation5 + $0x28] sm:$0xf]
    %v180 = vld [vmem:[#allocation5 + $0x2c] sm:$0xf]
    %v181 = vld [vmem:[#allocation5 + $0x30] sm:$0xf]
    %v182 = vld [vmem:[#allocation5 + $0x34] sm:$0xf]
    %v183 = vld [vmem:[#allocation5 + $0x38] sm:$0xf]
    %v184 = vld [vmem:[#allocation5 + $0x3c] sm:$0xf]
    %v185 = vld [vmem:[#allocation5 + $0x40] sm:$0xf]
    %v186 = vld [vmem:[#allocation5 + $0x44] sm:$0xf]
    %v187 = vld [vmem:[#allocation5 + $0x48] sm:$0xf]
    %v188 = vld [vmem:[#allocation5 + $0x4c] sm:$0xf]
    %v189 = vld [vmem:[#allocation5 + $0x50] sm:$0xf]
    %v190 = vld [vmem:[#allocation5 + $0x54] sm:$0xf]
    %v191 = vld [vmem:[#allocation5 + $0x58] sm:$0xf]
    %v192 = vld [vmem:[#allocation5 + $0x5c] sm:$0xf]
    %v193 = vld [vmem:[#allocation5 + $0x60] sm:$0x1]
    %v194 = vunpack.c.l.bf16 %v193
    %v195 = vpack.c.bf16 %v176, %v176
    %v196 = vlaneseq
    %v197 = vshrl.u32 %v196, 7
    %v198 = vsub.s32 0, %v197
    %v199 = vrot.slane %v194, %v198
    %v216 = vunpack.c.l.b16 %v177
    %v217 = vunpack.c.l.b16 %v178
    %v218 = vunpack.c.l.b16 %v179
    %v219 = vunpack.c.l.b16 %v180
    %v220 = vunpack.c.l.b16 %v181
    %v221 = vunpack.c.l.b16 %v182
    %v222 = vunpack.c.l.b16 %v183
    %v223 = vunpack.c.l.b16 %v184
    %v224 = vunpack.c.l.b16 %v185
    %v225 = vunpack.c.l.b16 %v186
    %v226 = vunpack.c.l.b16 %v187
    %v227 = vunpack.c.l.b16 %v188
    %v228 = vunpack.c.l.b16 %v189
    %v229 = vunpack.c.l.b16 %v190
    %v230 = vunpack.c.l.b16 %v191
    %v231 = vunpack.c.l.b16 %v192
    %v232 = vpack.c.b16 %v217, %v216
    %v233 = vpack.c.b16 %v219, %v218
    %v234 = vpack.c.b16 %v221, %v220
    %v235 = vpack.c.b16 %v223, %v222
    %v236 = vpack.c.b16 %v225, %v224
    %v237 = vpack.c.b16 %v227, %v226
    %v238 = vpack.c.b16 %v229, %v228
    %v239 = vpack.c.b16 %v231, %v230
    %248 = vmatprep.subr.bf16.mxu0 0
    %249 = vmatpush1.bf16.msra.mxu0 %v232
    %250 = vmatprep.subr.bf16.mxu0 0
    %251 = vmatpush1.bf16.msra.mxu0 %v233
    %252 = vmatprep.subr.bf16.mxu0 0
    %253 = vmatpush1.bf16.msra.mxu0 %v234
    %254 = vmatprep.subr.bf16.mxu0 0
    %255 = vmatpush1.bf16.msra.mxu0 %v235
    %256 = vmatprep.subr.bf16.mxu0 0
    %257 = vmatpush1.bf16.msra.mxu0 %v236
    %258 = vmatprep.subr.bf16.mxu0 0
    %259 = vmatpush1.bf16.msra.mxu0 %v237
    %260 = vmatprep.subr.bf16.mxu0 0
    %261 = vmatpush1.bf16.msra.mxu0 %v238
    %262 = vmatprep.subr.bf16.mxu0 0
    %263 = vmatpush1.bf16.msra.mxu0 %v239
    %264 = vmatprep.subr.bf16.mxu0 0
    %265 = vmatpush1.bf16.msra.mxu0 0
    %266 = vmatprep.subr.bf16.mxu0 0
    %267 = vmatpush1.bf16.msra.mxu0 0
    %268 = vmatprep.subr.bf16.mxu0 0
    %269 = vmatpush1.bf16.msra.mxu0 0
    %270 = vmatprep.subr.bf16.mxu0 0
    %271 = vmatpush1.bf16.msra.mxu0 0
    %272 = vmatprep.subr.bf16.mxu0 0
    %273 = vmatpush1.bf16.msra.mxu0 0
    %274 = vmatprep.subr.bf16.mxu0 0
    %275 = vmatpush1.bf16.msra.mxu0 0
    %276 = vmatprep.subr.bf16.mxu0 0
    %277 = vmatpush1.bf16.msra.mxu0 0
    %278 = vmatprep.subr.bf16.mxu0 0
    %279 = vmatpush1.bf16.msra.mxu0 0
    %280 = vmatprep.mubr.bf16.mxu0 0
    %281 = vmatmul.mubr.bf16.gmra.mrb[0].mxu0 %v195
    %v282 = vpop.f32.mrb[0].mxu0
    %v283 = vadd.f32 %v199, %v282
    %v284 = vpop.f32.mrb[0].mxu0
    %v285 = vpop.f32.mrb[0].mxu0
    %v286 = vpop.f32.mrb[0].mxu0
    %287 = vdwg.mxu0
    %v288 = vsub.f32 0.0, %v283
    %v289 = vmul.f32 %v288, 1.442695
    %v290 = vpow.pop %v289
    %v291 = vadd.f32 %v290, 1.0
    %v292 = vrcp.pop %v291
    %v293 = vld [vmem:[#allocation5 + $0x68] sm:$0xf]
    %v294 = vunpack.c.l.bf16 %v293
    %v295 = vld [vmem:[#allocation5 + $0x70] sm:$0x1]
    %v296 = vunpack.c.l.bf16 %v295
    %v297 = vlaneseq
    %v298 = vshrl.u32 %v297, 7
    %v299 = vsub.s32 0, %v298
    %v300 = vrot.slane %v296, %v299
    %vm301 = vcmask 64512
    %v303 = vsel %vm301, %v292, 0
    %305 = vmatprep.subr.mxu0 0.0
    %306 = vmatpush1.msra.mxu0 %v294
    %307 = vmatprep.subr.mxu0 0.0
    %308 = vmatpush1.msra.mxu0 0.0
    %309 = vmatprep.subr.mxu0 0.0
    %310 = vmatpush1.msra.mxu0 0.0
    %311 = vmatprep.subr.mxu0 0.0
    %312 = vmatpush1.msra.mxu0 0.0
    %313 = vmatprep.subr.mxu0 0.0
    %314 = vmatpush1.msra.mxu0 0.0
    %315 = vmatprep.subr.mxu0 0.0
    %316 = vmatpush1.msra.mxu0 0.0
    %317 = vmatprep.subr.mxu0 0.0
    %318 = vmatpush1.msra.mxu0 0.0
    %319 = vmatprep.subr.mxu0 0.0
    %320 = vmatpush1.msra.mxu0 0.0
    %321 = vmatprep.subr.mxu0 0.0
    %322 = vmatpush1.msra.mxu0 0.0
    %323 = vmatprep.subr.mxu0 0.0
    %324 = vmatpush1.msra.mxu0 0.0
    %325 = vmatprep.subr.mxu0 0.0
    %326 = vmatpush1.msra.mxu0 0.0
    %327 = vmatprep.subr.mxu0 0.0
    %328 = vmatpush1.msra.mxu0 0.0
    %329 = vmatprep.subr.mxu0 0.0
    %330 = vmatpush1.msra.mxu0 0.0
    %331 = vmatprep.subr.mxu0 0.0
    %332 = vmatpush1.msra.mxu0 0.0
    %333 = vmatprep.subr.mxu0 0.0
    %334 = vmatpush1.msra.mxu0 0.0
    %335 = vmatprep.subr.mxu0 0.0
    %336 = vmatpush1.msra.mxu0 0.0
    %337 = vmatprep.subr.mxu0 0.0
    %338 = vmatpush1.msra.mxu0 0.0
    %339 = vmatprep.subr.mxu0 0.0
    %340 = vmatpush1.msra.mxu0 0.0
    %341 = vmatprep.subr.mxu0 0.0
    %342 = vmatpush1.msra.mxu0 0.0
    %343 = vmatprep.subr.mxu0 0.0
    %344 = vmatpush1.msra.mxu0 0.0
    %345 = vmatprep.subr.mxu0 0.0
    %346 = vmatpush1.msra.mxu0 0.0
    %347 = vmatprep.subr.mxu0 0.0
    %348 = vmatpush1.msra.mxu0 0.0
    %349 = vmatprep.subr.mxu0 0.0
    %350 = vmatpush1.msra.mxu0 0.0
    %351 = vmatprep.subr.mxu0 0.0
    %352 = vmatpush1.msra.mxu0 0.0
    %353 = vmatprep.subr.mxu0 0.0
    %354 = vmatpush1.msra.mxu0 0.0
    %355 = vmatprep.subr.mxu0 0.0
    %356 = vmatpush1.msra.mxu0 0.0
    %357 = vmatprep.subr.mxu0 0.0
    %358 = vmatpush1.msra.mxu0 0.0
    %359 = vmatprep.subr.mxu0 0.0
    %360 = vmatpush1.msra.mxu0 0.0
    %361 = vmatprep.subr.mxu0 0.0
    %362 = vmatpush1.msra.mxu0 0.0
    %363 = vmatprep.subr.mxu0 0.0
    %364 = vmatpush1.msra.mxu0 0.0
    %365 = vmatprep.subr.mxu0 0.0
    %366 = vmatpush1.msra.mxu0 0.0
    %367 = vmatprep.subr.mxu0 0.0
    %368 = vmatpush1.msra.mxu0 0.0
    %369 = vmatprep.mubr.f32.mxu0 0.0
    %370 = vmatmul.mubr.f32.gmra.mrb[0].mxu0 %v303
    %v371 = vpop.f32.mrb[0].mxu0
    %v372 = vadd.f32 %v300, %v371
    %v373 = vpop.f32.mrb[0].mxu0
    %374 = vdwg.mxu0
    %375 = vst [vmem:[#allocation7] sm:$0x3] %v372
    // Predicated region
    $region22: #{tpu_custom_call.1} parent=1 // pred_check
      _
    $region23: #{tpu_custom_call.1} parent=1 // pred_check_branch
      %377 = sbr.rel (0) target = $region25
    $region24: #{tpu_custom_call.1} parent=1 // pred_region
      %s379 = ssub.s32 32, 32
      %380 = vsyncadd [#allocation4], %s379
      %s382 = sshll.u32 [#allocation7], 4
      %s383 = int_to_ptr.vmem [resolvable:$true] %s382
      %385 = dma.vmem_to_hbm [thread:$0]  %s383, 32, %s3, [#allocation4]
    $region25: #{tpu_custom_call.1} parent=1 // pred_fallthru
      _
    // Predicated region
    $region26: #{tpu_custom_call.1} parent=1 // pred_check
      _
    $region27: #{tpu_custom_call.1} parent=1 // pred_check_branch
      %387 = sbr.rel (0) target = $region29
    $region28: #{tpu_custom_call.1} parent=1 // pred_region
      %388 = dma.done [#allocation4], 32
    $region29: #{tpu_custom_call.1} parent=1 // pred_fallthru
      _
    %389 = vsyncpa [#allocation3], 1
    %390 = vsyncpa [#allocation6], 1
    %391 = vsyncpa [#allocation4], 1

</llo_original>
